<compile_context>
chip_gen: v7x
topology: tpu7x:2x2x1
jax: 0.10.0
libtpu: 0.0.40
codegen_flags: <defaults>
</compile_context>

<pallas_src>
import functools

import jax
import jax.numpy as jnp
from jax.experimental import pallas as pl
from jax.experimental.pallas import tpu as pltpu

BN_EPS = 1e-5


def _round_up(x, m):
    return ((x + m - 1) // m) * m


def fc_bn_relu_kernel(x_ref, w_ref, gamma_ref, beta_ref, o_ref, *, inv_n):
    # Linear: y = x @ W  (MXU, f32 accumulation). Bias omitted on purpose —
    # it cancels exactly under the batch-mean subtraction below.
    x = x_ref[...].astype(jnp.float32)
    w = w_ref[...].astype(jnp.float32)
    y = jnp.dot(x, w, preferred_element_type=jnp.float32)        # [N, tn]

    # BatchNorm1d (training mode): per-feature mean / biased variance over the
    # batch axis, computed in one pass via sums (XLU reductions).
    s1 = jnp.sum(y, axis=0, keepdims=True)
    s2 = jnp.sum(y * y, axis=0, keepdims=True)
    mean = s1 * inv_n
    var = jnp.maximum(s2 * inv_n - mean * mean, 0.0)
    inv_std = jax.lax.rsqrt(var + BN_EPS)                        # EUP

    out = (y - mean) * (inv_std * gamma_ref[...]) + beta_ref[...]
    o_ref[...] = jnp.maximum(out, 0.0).astype(o_ref.dtype)       # ReLU


def fully_connected_forward(x, w_t, gamma, beta, *, tn=128):
    """Fused Linear -> BatchNorm1d(training) -> ReLU.

    x:     [N, D_in]     (batch-major, features on lanes)
    w_t:   [D_in, D_out] (transposed vs. PyTorch's [out, in])
    gamma: [1, D_out], beta: [1, D_out]  (BatchNorm affine params)

    The linear bias is intentionally not an argument: with training-mode BN it
    is mathematically cancelled by the mean subtraction.
    """
    n, d_in = x.shape
    d_out = w_t.shape[1]

    # Lane-dense output: pad D_OUT up to a multiple of the tile width (128).
    d_pad = _round_up(d_out, tn)
    if d_pad != d_out:
        pad = d_pad - d_out
        w_t = jnp.pad(w_t, ((0, 0), (0, pad)))
        gamma = jnp.pad(gamma, ((0, 0), (0, pad)))
        beta = jnp.pad(beta, ((0, 0), (0, pad)))

    kernel = functools.partial(fc_bn_relu_kernel, inv_n=1.0 / n)

    cost = pl.CostEstimate(
        flops=2 * n * d_in * d_pad,
        transcendentals=d_pad,                         # rsqrt per output feature
        bytes_accessed=4 * (n * d_in + d_in * d_pad + 2 * d_pad + n * d_pad),
    )

    out = pl.pallas_call(
        kernel,
        out_shape=jax.ShapeDtypeStruct((n, d_pad), jnp.float32),
        grid=(d_pad // tn,),
        in_specs=[
            pl.BlockSpec((n, d_in), lambda j: (0, 0)),    # full batch resident (exact BN stats)
            pl.BlockSpec((d_in, tn), lambda j: (0, j)),   # weight tile stream (double-buffered)
            pl.BlockSpec((1, tn), lambda j: (0, j)),      # gamma tile
            pl.BlockSpec((1, tn), lambda j: (0, j)),      # beta tile
        ],
        out_specs=pl.BlockSpec((n, tn), lambda j: (0, j)),  # lane-dense output tile
        compiler_params=pltpu.CompilerParams(
            # D_OUT tiles are fully independent (per-feature BN) -> parallel
            # axis; shards across both TensorCores on v7x.
            dimension_semantics=("parallel",),
        ),
        cost_estimate=cost,
    )(x, w_t, gamma, beta)

    return out[:, :d_out]


if __name__ == "__main__":
    # Small shapes consistent with the module: batch=8, inp_dim=32, out_dim=64.
    N, D_IN, D_OUT = 8, 32, 64
    key = jax.random.PRNGKey(0)
    kx, kw, kb = jax.random.split(key, 3)

    x = jax.random.normal(kx, (N, D_IN), dtype=jnp.float32)

    # Deterministic parameter init (PyTorch nn.Linear-style uniform bound).
    bound = 1.0 / jnp.sqrt(jnp.float32(D_IN))
    w = jax.random.uniform(kw, (D_OUT, D_IN), minval=-bound, maxval=bound,
                           dtype=jnp.float32)           # PyTorch layout [out, in]
    bias = jax.random.uniform(kb, (1, D_OUT), minval=-bound, maxval=bound,
                              dtype=jnp.float32)        # kept only for the reference
    gamma = jnp.ones((1, D_OUT), dtype=jnp.float32)     # BatchNorm1d weight init
    beta = jnp.zeros((1, D_OUT), dtype=jnp.float32)     # BatchNorm1d bias init

    w_t = w.T  # [D_in, D_out] for lane-dense matmul in-kernel

    out = fully_connected_forward(x, w_t, gamma, beta)
    out = jax.block_until_ready(out)

    # Pure-JAX reference WITH the linear bias (exact PyTorch semantics:
    # Linear -> training-mode BN -> ReLU). The kernel drops the bias because
    # it is cancelled by the BN mean subtraction; results must still agree.
    y_ref = x @ w_t + bias
    mean = y_ref.mean(axis=0, keepdims=True)
    var = ((y_ref - mean) ** 2).mean(axis=0, keepdims=True)
    ref = jnp.maximum((y_ref - mean) / jnp.sqrt(var + BN_EPS) * gamma + beta, 0.0)
    assert out.shape == (N, D_OUT)
    assert jnp.allclose(out, ref, atol=1e-4, rtol=1e-4), "mismatch vs reference"

    print("KERNEL_OK")
</pallas_src>

<mosaic_0001>
module attributes {stable_mosaic.version = 11 : i64} {
  func.func @fc_bn_relu_kernel(%arg0: i32, %arg1: memref<8x32xf32, #tpu.memory_space<vmem>>, %arg2: memref<32x128xf32, #tpu.memory_space<vmem>>, %arg3: memref<1x128xf32, #tpu.memory_space<vmem>>, %arg4: memref<1x128xf32, #tpu.memory_space<vmem>>, %arg5: memref<8x128xf32, #tpu.memory_space<vmem>>) attributes {dimension_semantics = [#tpu.dimension_semantics<parallel>], iteration_bounds = array<i64: 1>, scalar_prefetch = 0 : i64, scratch_operands = 0 : i64, tpu.core_type = #tpu.core_type<tc>, window_params = [{pipeline_mode = #tpu.pipeline_mode<synchronous>, transform_indices = @transform_0, window_bounds = array<i64: 8, 32>}, {transform_indices = @transform_1, window_bounds = array<i64: 32, 128>}, {transform_indices = @transform_2, window_bounds = array<i64: 1, 128>}, {transform_indices = @transform_3, window_bounds = array<i64: 1, 128>}, {transform_indices = @transform_4, window_bounds = array<i64: 8, 128>}]} {
    %c0 = arith.constant 0 : index
    %c0_0 = arith.constant 0 : index
    %0 = vector.load %arg1[%c0, %c0_0] : memref<8x32xf32, #tpu.memory_space<vmem>>, vector<8x32xf32>
    %c0_1 = arith.constant 0 : index
    %c0_2 = arith.constant 0 : index
    %1 = vector.load %arg2[%c0_1, %c0_2] : memref<32x128xf32, #tpu.memory_space<vmem>>, vector<32x128xf32>
    %cst = arith.constant dense<0.000000e+00> : vector<8x128xf32>
    %2 = tpu.matmul %0, %1, %cst {dimension_numbers = #tpu.dot_dimension_numbers<[1], [0], [0], [1], [0, 0, 1, 1], [], []>} : vector<8x32xf32>, vector<32x128xf32>, vector<8x128xf32> -> vector<8x128xf32>
    %cst_3 = arith.constant dense<0.000000e+00> : vector<128xf32>
    %3 = vector.multi_reduction <add>, %2, %cst_3 [0] : vector<8x128xf32> to vector<128xf32>
    %4 = vector.shape_cast %3 : vector<128xf32> to vector<1x128xf32>
    %5 = arith.mulf %2, %2 : vector<8x128xf32>
    %cst_4 = arith.constant dense<0.000000e+00> : vector<128xf32>
    %6 = vector.multi_reduction <add>, %5, %cst_4 [0] : vector<8x128xf32> to vector<128xf32>
    %7 = vector.shape_cast %6 : vector<128xf32> to vector<1x128xf32>
    %cst_5 = arith.constant 1.250000e-01 : f32
    %8 = vector.broadcast %cst_5 : f32 to vector<1x128xf32>
    %9 = arith.mulf %4, %8 : vector<1x128xf32>
    %cst_6 = arith.constant 1.250000e-01 : f32
    %10 = vector.broadcast %cst_6 : f32 to vector<1x128xf32>
    %11 = arith.mulf %7, %10 : vector<1x128xf32>
    %12 = arith.mulf %9, %9 : vector<1x128xf32>
    %13 = arith.subf %11, %12 : vector<1x128xf32>
    %cst_7 = arith.constant 0.000000e+00 : f32
    %14 = vector.broadcast %cst_7 : f32 to vector<1x128xf32>
    %15 = arith.maximumf %13, %14 : vector<1x128xf32>
    %cst_8 = arith.constant 9.99999974E-6 : f32
    %16 = vector.broadcast %cst_8 : f32 to vector<1x128xf32>
    %17 = arith.addf %15, %16 : vector<1x128xf32>
    %18 = math.rsqrt %17 : vector<1x128xf32>
    %19 = vector.broadcast %9 : vector<1x128xf32> to vector<8x128xf32>
    %20 = arith.subf %2, %19 : vector<8x128xf32>
    %c0_9 = arith.constant 0 : index
    %c0_10 = arith.constant 0 : index
    %21 = vector.load %arg3[%c0_9, %c0_10] : memref<1x128xf32, #tpu.memory_space<vmem>>, vector<1x128xf32>
    %22 = arith.mulf %18, %21 : vector<1x128xf32>
    %23 = vector.broadcast %22 : vector<1x128xf32> to vector<8x128xf32>
    %24 = arith.mulf %20, %23 : vector<8x128xf32>
    %c0_11 = arith.constant 0 : index
    %c0_12 = arith.constant 0 : index
    %25 = vector.load %arg4[%c0_11, %c0_12] : memref<1x128xf32, #tpu.memory_space<vmem>>, vector<1x128xf32>
    %26 = vector.broadcast %25 : vector<1x128xf32> to vector<8x128xf32>
    %27 = arith.addf %24, %26 : vector<8x128xf32>
    %cst_13 = arith.constant 0.000000e+00 : f32
    %28 = vector.broadcast %cst_13 : f32 to vector<8x128xf32>
    %29 = arith.maximumf %27, %28 : vector<8x128xf32>
    %c0_14 = arith.constant 0 : index
    %c0_15 = arith.constant 0 : index
    %30 = vector.load %arg5[%c0_14, %c0_15] : memref<8x128xf32, #tpu.memory_space<vmem>>, vector<8x128xf32>
    tpu.vector_store %arg5[%c0_14, %c0_15], %29 {strides = array<i32>} : memref<8x128xf32, #tpu.memory_space<vmem>>, vector<8x128xf32>,
    return
  }
  func.func @transform_0(%arg0: i32) -> (i32, i32) {
    %c0_i32 = arith.constant 0 : i32
    %c0_i32_0 = arith.constant 0 : i32
    %c0_i32_1 = arith.constant 0 : i32
    return %c0_i32, %c0_i32_0 : i32, i32
  }
  func.func @transform_1(%arg0: i32) -> (i32, i32) {
    %c0_i32 = arith.constant 0 : i32
    %c0_i32_0 = arith.constant 0 : i32
    return %c0_i32, %arg0 : i32, i32
  }
  func.func @transform_2(%arg0: i32) -> (i32, i32) {
    %c0_i32 = arith.constant 0 : i32
    %c0_i32_0 = arith.constant 0 : i32
    return %c0_i32, %arg0 : i32, i32
  }
  func.func @transform_3(%arg0: i32) -> (i32, i32) {
    %c0_i32 = arith.constant 0 : i32
    %c0_i32_0 = arith.constant 0 : i32
    return %c0_i32, %arg0 : i32, i32
  }
  func.func @transform_4(%arg0: i32) -> (i32, i32) {
    %c0_i32 = arith.constant 0 : i32
    %c0_i32_0 = arith.constant 0 : i32
    return %c0_i32, %arg0 : i32, i32
  }
}

</mosaic_0001>

<llo_original>
// kernel: tpu_custom_call.1
$region0: #{tpu_custom_call.1}
  #allocation0 [shape = 'u32[]', space=smem, size = 0x4, offset = 0x4, fixed_abs, tag = 'smem constant byte address 0x4 - core index']
  #allocation1 [shape = 'u32[144,128]{1,0:T(1,128)}', space=vmem, size = 0x12000, scoped, tag = 'internal scratch']
  %s0 = inlined_call_operand.hbm [shape: f32[8,32], index: 0, kind: input, shape index: {}]
  %s1 = inlined_call_operand.hbm [shape: f32[32,128], index: 1, kind: input, shape index: {}]
  %s2 = inlined_call_operand.vmem [shape: f32[1,128], index: 2, kind: input, shape index: {}]
  %s3 = inlined_call_operand.vmem [shape: f32[1,128], index: 3, kind: input, shape index: {}]
  %s4 = inlined_call_operand.hbm [shape: f32[8,128], index: 4, kind: output, shape index: {}]
  %s5 = sld [smem:[#allocation0]]
  $region34: #{tpu_custom_call.1} parent=0
    _
  %s7 = ssub.s32 1, %s5
  %s8 = scalar_select 0, %s7, %s5
  $region1: #{tpu_custom_call.1} parent=0
    #allocation2 [shape = 'u8[4096]{0}', space=vmem, size = 0x1000, scoped, tag = 'input window, operand 0, single buffered']
    #allocation3 [shape = 's32[1]{0}', space=sflag, size = 0x4, scoped, tag = 'scoped memory for tpu_custom_call.1']
    #allocation4 [shape = 's32[1]{0}', space=sflag, size = 0x4, scoped, tag = 'scoped memory for tpu_custom_call.1']
    #allocation5 [shape = 'u8[16384]{0}', space=vmem, size = 0x4000, scoped, tag = 'input window, operand 1, single buffered']
    #allocation6 [shape = 's32[1]{0}', space=sflag, size = 0x4, scoped, tag = 'scoped memory for tpu_custom_call.1']
    #allocation7 [shape = 'u8[4096]{0}', space=vmem, size = 0x1000, scoped, tag = 'output window, operand 0, single buffered']
    %9 = vsyncpa [#allocation3], 0
    %10 = vsyncpa [#allocation6], 0
    %11 = vsyncpa [#allocation4], 0
    // Predicated region
    $region2: #{tpu_custom_call.1} parent=1 // pred_check
      _
    $region3: #{tpu_custom_call.1} parent=1 // pred_check_branch
      %13 = sbr.rel (0) target = $region5
    $region4: #{tpu_custom_call.1} parent=1 // pred_region
      %s15 = ssub.s32 128, 128
      %16 = vsyncadd [#allocation3], %s15
      %s18 = sshll.u32 [#allocation2], 4
      %s19 = int_to_ptr.vmem [resolvable:$true] %s18
      %21 = dma.hbm_to_vmem [thread:$0]  %s0, 128, %s19, [#allocation3]
    $region5: #{tpu_custom_call.1} parent=1 // pred_fallthru
      _
    // Predicated region
    $region6: #{tpu_custom_call.1} parent=1 // pred_check
      _
    $region7: #{tpu_custom_call.1} parent=1 // pred_check_branch
      %23 = sbr.rel (0) target = $region9
    $region8: #{tpu_custom_call.1} parent=1 // pred_region
      %s25 = ssub.s32 512, 512
      %26 = vsyncadd [#allocation6], %s25
      %s27 = sshll.u32 [#allocation5], 4
      %s28 = int_to_ptr.vmem [resolvable:$true] %s27
      %33 = dma.hbm_to_vmem [thread:$0]  %s1, 512, %s28, [#allocation6], 128, 128, 8
    $region9: #{tpu_custom_call.1} parent=1 // pred_fallthru
      _
    // Predicated region
    $region10: #{tpu_custom_call.1} parent=1 // pred_check
      _
    $region11: #{tpu_custom_call.1} parent=1 // pred_check_branch
      %35 = sbr.rel (0) target = $region13
    $region12: #{tpu_custom_call.1} parent=1 // pred_region
      _
    $region13: #{tpu_custom_call.1} parent=1 // pred_fallthru
      _
    // Predicated region
    $region14: #{tpu_custom_call.1} parent=1 // pred_check
      _
    $region15: #{tpu_custom_call.1} parent=1 // pred_check_branch
      %37 = sbr.rel (0) target = $region17
    $region16: #{tpu_custom_call.1} parent=1 // pred_region
      _
    $region17: #{tpu_custom_call.1} parent=1 // pred_fallthru
      _
    // Predicated region
    $region18: #{tpu_custom_call.1} parent=1 // pred_check
      _
    $region19: #{tpu_custom_call.1} parent=1 // pred_check_branch
      %39 = sbr.rel (0) target = $region21
    $region20: #{tpu_custom_call.1} parent=1 // pred_region
      %40 = dma.done [#allocation3], 128
    $region21: #{tpu_custom_call.1} parent=1 // pred_fallthru
      _
    // Predicated region
    $region22: #{tpu_custom_call.1} parent=1 // pred_check
      _
    $region23: #{tpu_custom_call.1} parent=1 // pred_check_branch
      %42 = sbr.rel (0) target = $region25
    $region24: #{tpu_custom_call.1} parent=1 // pred_region
      %43 = dma.done [#allocation6], 512
    $region25: #{tpu_custom_call.1} parent=1 // pred_fallthru
      _
    %v44 = vld [vmem:[#allocation2] sm:$0xff]
    %v45 = vld [vmem:[#allocation5] sm:$0xff]
    %v46 = vld [vmem:[#allocation5 + $0x8] sm:$0xff]
    %v47 = vld [vmem:[#allocation5 + $0x10] sm:$0xff]
    %v48 = vld [vmem:[#allocation5 + $0x18] sm:$0xff]
    %vm49 = vcmask 261120
    %v51 = vsel %vm49, %v44, 0
    %53 = vmatprep.subr.mxu0 0.0
    %54 = vmatpush1.msra.mxu0 %v45
    %55 = vmatprep.subr.mxu0 0.0
    %56 = vmatpush1.msra.mxu0 %v46
    %57 = vmatprep.subr.mxu0 0.0
    %58 = vmatpush1.msra.mxu0 %v47
    %59 = vmatprep.subr.mxu0 0.0
    %60 = vmatpush1.msra.mxu0 %v48
    %61 = vmatprep.subr.mxu0 0.0
    %62 = vmatpush1.msra.mxu0 0.0
    %63 = vmatprep.subr.mxu0 0.0
    %64 = vmatpush1.msra.mxu0 0.0
    %65 = vmatprep.subr.mxu0 0.0
    %66 = vmatpush1.msra.mxu0 0.0
    %67 = vmatprep.subr.mxu0 0.0
    %68 = vmatpush1.msra.mxu0 0.0
    %69 = vmatprep.subr.mxu0 0.0
    %70 = vmatpush1.msra.mxu0 0.0
    %71 = vmatprep.subr.mxu0 0.0
    %72 = vmatpush1.msra.mxu0 0.0
    %73 = vmatprep.subr.mxu0 0.0
    %74 = vmatpush1.msra.mxu0 0.0
    %75 = vmatprep.subr.mxu0 0.0
    %76 = vmatpush1.msra.mxu0 0.0
    %77 = vmatprep.subr.mxu0 0.0
    %78 = vmatpush1.msra.mxu0 0.0
    %79 = vmatprep.subr.mxu0 0.0
    %80 = vmatpush1.msra.mxu0 0.0
    %81 = vmatprep.subr.mxu0 0.0
    %82 = vmatpush1.msra.mxu0 0.0
    %83 = vmatprep.subr.mxu0 0.0
    %84 = vmatpush1.msra.mxu0 0.0
    %85 = vmatprep.subr.mxu0 0.0
    %86 = vmatpush1.msra.mxu0 0.0
    %87 = vmatprep.subr.mxu0 0.0
    %88 = vmatpush1.msra.mxu0 0.0
    %89 = vmatprep.subr.mxu0 0.0
    %90 = vmatpush1.msra.mxu0 0.0
    %91 = vmatprep.subr.mxu0 0.0
    %92 = vmatpush1.msra.mxu0 0.0
    %93 = vmatprep.subr.mxu0 0.0
    %94 = vmatpush1.msra.mxu0 0.0
    %95 = vmatprep.subr.mxu0 0.0
    %96 = vmatpush1.msra.mxu0 0.0
    %97 = vmatprep.subr.mxu0 0.0
    %98 = vmatpush1.msra.mxu0 0.0
    %99 = vmatprep.subr.mxu0 0.0
    %100 = vmatpush1.msra.mxu0 0.0
    %101 = vmatprep.subr.mxu0 0.0
    %102 = vmatpush1.msra.mxu0 0.0
    %103 = vmatprep.subr.mxu0 0.0
    %104 = vmatpush1.msra.mxu0 0.0
    %105 = vmatprep.subr.mxu0 0.0
    %106 = vmatpush1.msra.mxu0 0.0
    %107 = vmatprep.subr.mxu0 0.0
    %108 = vmatpush1.msra.mxu0 0.0
    %109 = vmatprep.subr.mxu0 0.0
    %110 = vmatpush1.msra.mxu0 0.0
    %111 = vmatprep.subr.mxu0 0.0
    %112 = vmatpush1.msra.mxu0 0.0
    %113 = vmatprep.subr.mxu0 0.0
    %114 = vmatpush1.msra.mxu0 0.0
    %115 = vmatprep.subr.mxu0 0.0
    %116 = vmatpush1.msra.mxu0 0.0
    %117 = vmatprep.mubr.f32.mxu0 0.0
    %118 = vmatmul.mubr.f32.gmra.mrb[0].mxu0 %v51
    %v119 = vpop.f32.mrb[0].mxu0
    %v120 = vadd.f32 0.0, %v119
    %v121 = vpop.f32.mrb[0].mxu0
    %122 = vdwg.mxu0
    %v123 = vrot.slane %v120, 4
    %v124 = vadd.f32 %v120, %v123
    %v125 = vrot.slane %v124, 2
    %v126 = vadd.f32 %v124, %v125
    %v127 = vrot.slane %v126, 1
    %v128 = vadd.f32 %v126, %v127
    %v129 = vmul.f32 %v120, %v120
    %v130 = vrot.slane %v129, 4
    %v131 = vadd.f32 %v129, %v130
    %v132 = vrot.slane %v131, 2
    %v133 = vadd.f32 %v131, %v132
    %v134 = vrot.slane %v133, 1
    %v135 = vadd.f32 %v133, %v134
    %v136 = vmul.f32 %v128, 0.125
    %v137 = vmul.f32 %v135, 0.125
    %v138 = vmul.f32 %v136, %v136
    %v139 = vsub.f32 %v137, %v138
    %v140 = vmax.f32 %v139, 0.0
    %v141 = vadd.f32 %v140, 1e-05
    %v142 = vrsqrt.pop %v141
    %v143 = vsub.f32 %v120, %v136
    %v144 = vld [vmem:[%s2] sm:$0x1]
    %v145 = vmul.f32 %v142, %v144
    %v146 = vlaneseq
    %v147 = vshrl.u32 %v146, 7
    %v148 = vsub.s32 0, %v147
    %v149 = vrot.slane %v145, %v148
    %v150 = vmul.f32 %v143, %v149
    %v151 = vld [vmem:[%s3] sm:$0x1]
    %v153 = vlaneseq
    %v154 = vshrl.u32 %v153, 7
    %v155 = vsub.s32 0, %v154
    %v156 = vrot.slane %v151, %v155
    %v158 = vadd.f32 %v150, %v156
    %v159 = vmax.f32 %v158, 0.0
    %160 = vst [vmem:[#allocation7] sm:$0xff] %v159
    // Predicated region
    $region26: #{tpu_custom_call.1} parent=1 // pred_check
      _
    $region27: #{tpu_custom_call.1} parent=1 // pred_check_branch
      %162 = sbr.rel (0) target = $region29
    $region28: #{tpu_custom_call.1} parent=1 // pred_region
      %s164 = ssub.s32 128, 128
      %165 = vsyncadd [#allocation4], %s164
      %s167 = sshll.u32 [#allocation7], 4
      %s168 = int_to_ptr.vmem [resolvable:$true] %s167
      %170 = dma.vmem_to_hbm [thread:$0]  %s168, 128, %s4, [#allocation4]
    $region29: #{tpu_custom_call.1} parent=1 // pred_fallthru
      _
    // Predicated region
    $region30: #{tpu_custom_call.1} parent=1 // pred_check
      _
    $region31: #{tpu_custom_call.1} parent=1 // pred_check_branch
      %172 = sbr.rel (0) target = $region33
    $region32: #{tpu_custom_call.1} parent=1 // pred_region
      %173 = dma.done [#allocation4], 128
    $region33: #{tpu_custom_call.1} parent=1 // pred_fallthru
      _
    %174 = vsyncpa [#allocation3], 1
    %175 = vsyncpa [#allocation6], 1
    %176 = vsyncpa [#allocation4], 1

</llo_original>
